<compile_context>
chip_gen: v7x
topology: tpu7x:2x2x1
jax: 0.10.0
libtpu: 0.0.40
codegen_flags: <defaults>
</compile_context>

<pallas_src>
import functools

import jax
import jax.numpy as jnp
from jax.experimental import pallas as pl
from jax.experimental.pallas import tpu as pltpu


def _round_up(n, m):
    return ((n + m - 1) // m) * m


def _cdiv(n, m):
    return (n + m - 1) // m


_DEFAULT_VMEM_BUDGET = 40 << 20  # conservative: fits v7x's 64 MiB/TC with headroom


def _vmem_budget_bytes():
    # Per-generation VMEM budget for picking the sequence tile (double-buffered
    # inputs + outputs + in-kernel temporaries must fit with headroom).
    try:
        cap = pltpu.get_tpu_info().vmem_capacity_bytes
    except Exception:
        return _DEFAULT_VMEM_BUDGET
    return min(int(cap * 0.6), 48 << 20)


def _span_endpoints_kernel(xc_ref, xl_ref, o_ref, *, max_width, span_mode, seq_len,
                           tile_l, per_span, lane_aligned):
    """One (batch, sequence-tile) grid step.

    xc_ref: (1, tile_l, D)  current rows  [i*tile_l, i*tile_l + tile_l)
    xl_ref: (1, lk, D)      lookahead rows [(i+1)*tile_l, (i+1)*tile_l + lk)
                            (block index clamped in the index_map; masked here)
    o_ref : (1, tile_l, K*per_span)  lane-dense packed output tile
    """
    i = pl.program_id(1)
    base = i * tile_l
    d = xc_ref.shape[-1]
    lk = xl_ref.shape[1]

    # Zero every row whose *global* index is >= seq_len.  This reproduces the zero
    # padding of F.pad(x, (0,0,0,K-1)) with no HBM-side padding, and neutralizes the
    # garbage rows of partial / clamped boundary blocks.
    start = xc_ref[0]                                                   # (tile_l, D)
    row = jax.lax.broadcasted_iota(jnp.int32, (tile_l, 1), 0) + base
    start = jnp.where(row < seq_len, start, 0)

    look = xl_ref[0]                                                    # (lk, D)
    lrow = jax.lax.broadcasted_iota(jnp.int32, (lk, 1), 0) + (base + tile_l)
    look = jnp.where(lrow < seq_len, look, 0)

    # Rows [0, tile_l + lk) of the zero-padded sequence, local to this tile.
    combined = jnp.concatenate([start, look], axis=0)                   # (tile_l+lk, D)

    is_mean = span_mode == "endpoints_mean"
    start_half = start * 0.5 if is_mean else None                       # hoisted out of K loop

    pieces = []
    for k in range(max_width):                 # kernel_size = k + 1 -> end row l + k
        end_k = start if k == 0 else combined[k:k + tile_l, :]

        if span_mode == "endpoints_cat":
            if lane_aligned:
                off = k * per_span
                o_ref[0, :, off:off + d] = start.astype(o_ref.dtype)
                o_ref[0, :, off + d:off + per_span] = end_k.astype(o_ref.dtype)
            else:
                pieces.append(start.astype(o_ref.dtype))
                pieces.append(end_k.astype(o_ref.dtype))
        else:
            if is_mean:
                piece = start if k == 0 else start_half + end_k * 0.5
            else:  # endpoints_max
                piece = start if k == 0 else jnp.maximum(start, end_k)
            if lane_aligned:
                off = k * per_span
                o_ref[0, :, off:off + per_span] = piece.astype(o_ref.dtype)
            else:
                pieces.append(piece.astype(o_ref.dtype))

    if not lane_aligned:
        # D < 128: pack all K widths into one wide lane-dense row and write it with
        # a single store instead of K narrow masked stores.
        o_ref[0] = jnp.concatenate(pieces, axis=-1)


def span_endpoints_v2(x, max_width, span_mode="endpoints_mean", *, tile_l=512):
    """x: (B, L, D) -> (B, L, K, D) for mean/max, (B, L, K, 2D) for cat."""
    assert span_mode in ("endpoints_mean", "endpoints_max", "endpoints_cat")
    B, L, D = x.shape
    K = max_width
    itemsize = jnp.dtype(x.dtype).itemsize

    per_span = 2 * D if span_mode == "endpoints_cat" else D
    W = K * per_span
    lane_aligned = (D % 128 == 0)

    # Lookahead window: only the <= K-1 next-tile rows a span end can reach, rounded
    # to a packing-safe sublane multiple (16 covers bf16 too).
    lk = max(16, _round_up(max(K - 1, 1), 16))

    # Sequence tile: as large as the VMEM budget allows, a multiple of lk (so the
    # lookahead block index is exact), never larger than the (rounded) sequence.
    bytes_per_row = itemsize * (3 * D + 3 * W)      # ~2x in bufs + 2x out bufs + temps
    budget = _vmem_budget_bytes()
    tl_cap = max(lk, (budget // bytes_per_row) // lk * lk)
    tl = min(_round_up(tile_l, lk), tl_cap, _round_up(L, lk))
    tl = max(tl, lk)
    n_blocks = _cdiv(L, tl)

    # v7x megacore: both grid axes are "parallel"; if the whole job would be a single
    # grid step but the sequence is long, split it so both TensorCores get work.
    if B * n_blocks == 1 and L > 2 * lk:
        tl = max(lk, _round_up(_cdiv(L, 2), lk))
        n_blocks = _cdiv(L, tl)

    stride = tl // lk                               # exact: tl % lk == 0 by construction
    max_look_block = max(L - 1, 0) // lk            # last valid lookahead block index

    def look_index_map(b, i):
        # Clamp so the DMA start row always lies inside x; the kernel masks by the
        # *intended* global row index, so clamped (fully out-of-range) reads become 0.
        return (b, jnp.minimum((i + 1) * stride, max_look_block), 0)

    kernel = functools.partial(
        _span_endpoints_kernel, max_width=K, span_mode=span_mode, seq_len=L,
        tile_l=tl, per_span=per_span, lane_aligned=lane_aligned)

    flops_per_elem = {"endpoints_mean": 2, "endpoints_max": 1, "endpoints_cat": 0}[span_mode]
    cost = pl.CostEstimate(
        flops=flops_per_elem * B * L * K * D,
        transcendentals=0,
        bytes_accessed=itemsize * (B * L * D + B * n_blocks * lk * D + B * L * W))

    out = pl.pallas_call(
        kernel,
        out_shape=jax.ShapeDtypeStruct((B, L, W), x.dtype),
        grid_spec=pltpu.PrefetchScalarGridSpec(
            num_scalar_prefetch=0,
            grid=(B, n_blocks),
            in_specs=[
                pl.BlockSpec((1, tl, D), lambda b, i: (b, i, 0)),   # current tile
                pl.BlockSpec((1, lk, D), look_index_map),           # K-1 row lookahead
            ],
            out_specs=pl.BlockSpec((1, tl, W), lambda b, i: (b, i, 0)),
        ),
        compiler_params=pltpu.CompilerParams(
            dimension_semantics=("parallel", "parallel"),
            vmem_limit_bytes=min(budget + (8 << 20), 56 << 20)),
        cost_estimate=cost,
    )(x, x)

    # Splitting the packed last dim W -> (K, per_span) is a free reshape.
    return out.reshape(B, L, K, per_span)


def span_endpoints_v2_ref(x, max_width, span_mode="endpoints_mean"):
    """Pure-JAX reference mirroring the PyTorch module."""
    B, L, D = x.shape
    K = max_width
    xp = jnp.pad(x, ((0, 0), (0, K - 1), (0, 0)))
    reps = []
    for k in range(K):                                   # kernel_size = k + 1
        start = x
        end = jax.lax.dynamic_slice_in_dim(xp, k, L, axis=1)
        reps.append(jnp.stack([start, end], axis=-2))    # (B, L, 2, D)
    span = jnp.stack(reps, axis=-3)                      # (B, L, K, 2, D)
    if span_mode == "endpoints_mean":
        return jnp.mean(span, axis=-2)
    if span_mode == "endpoints_max":
        return jnp.max(span, axis=-2)
    return span.reshape(B, L, K, 2 * D)


if __name__ == "__main__":
    key = jax.random.PRNGKey(0)

    # Small shapes consistent with the module: batch=2, seq=8, hidden=32, max_width=4.
    # Exercises the packed-store path (D < 128) and a partial (ragged) block.
    B, L, D, K = 2, 8, 32, 4
    x = jax.random.normal(key, (B, L, D), dtype=jnp.float32)
    for mode in ("endpoints_mean", "endpoints_max", "endpoints_cat"):
        out = jax.block_until_ready(span_endpoints_v2(x, K, mode))
        ref = span_endpoints_v2_ref(x, K, mode)
        assert out.shape == ref.shape, (mode, out.shape, ref.shape)
        assert jnp.allclose(out, ref, atol=1e-6, rtol=1e-6), f"mismatch vs reference: {mode}"

    # Second config: multi-block grid, ragged last block, clamped lookahead, and the
    # lane-aligned per-width store path (D % 128 == 0).
    B2, L2, D2, K2 = 2, 50, 128, 6
    x2 = jax.random.normal(jax.random.PRNGKey(1), (B2, L2, D2), dtype=jnp.float32)
    for mode in ("endpoints_mean", "endpoints_max", "endpoints_cat"):
        out2 = jax.block_until_ready(span_endpoints_v2(x2, K2, mode, tile_l=16))
        ref2 = span_endpoints_v2_ref(x2, K2, mode)
        assert out2.shape == ref2.shape, (mode, out2.shape, ref2.shape)
        assert jnp.allclose(out2, ref2, atol=1e-6, rtol=1e-6), f"mismatch vs reference: {mode}"

    print("KERNEL_OK")
</pallas_src>

<mosaic_0001>
module attributes {stable_mosaic.version = 11 : i64} {
  func.func @_span_endpoints_kernel(%arg0: i32, %arg1: i32, %arg2: memref<1x16x32xf32, #tpu.memory_space<vmem>>, %arg3: memref<1x16x32xf32, #tpu.memory_space<vmem>>, %arg4: memref<1x16x128xf32, #tpu.memory_space<vmem>>) attributes {dimension_semantics = [#tpu.dimension_semantics<parallel>, #tpu.dimension_semantics<parallel>], iteration_bounds = array<i64: 2, 1>, scalar_prefetch = 0 : i64, scratch_operands = 0 : i64, tpu.core_type = #tpu.core_type<tc>, window_params = [{transform_indices = @transform_0, window_bounds = array<i64: 1, 16, 32>}, {transform_indices = @transform_1, window_bounds = array<i64: 1, 16, 32>}, {transform_indices = @transform_2, window_bounds = array<i64: 1, 16, 128>}]} {
    %c16_i32 = arith.constant 16 : i32
    %0 = arith.muli %arg1, %c16_i32 : i32
    %c0 = arith.constant 0 : index
    %c0_0 = arith.constant 0 : index
    %c0_1 = arith.constant 0 : index
    %1 = vector.load %arg2[%c0, %c0_0, %c0_1] : memref<1x16x32xf32, #tpu.memory_space<vmem>>, vector<1x16x32xf32>
    %2 = vector.shape_cast %1 : vector<1x16x32xf32> to vector<16x32xf32>
    %3 = tpu.iota {dimensions = array<i32: 0>} : vector<16x1xi32>
    %4 = vector.broadcast %0 : i32 to vector<16x1xi32>
    %5 = arith.addi %3, %4 : vector<16x1xi32>
    %c8_i32 = arith.constant 8 : i32
    %6 = vector.broadcast %c8_i32 : i32 to vector<16x1xi32>
    %7 = arith.cmpi slt, %5, %6 : vector<16x1xi32>
    %c0_i32 = arith.constant 0 : i32
    %8 = arith.sitofp %c0_i32 : i32 to f32
    %9 = vector.shape_cast %7 : vector<16x1xi1> to vector<16x1xi1>
    %10 = vector.broadcast %9 : vector<16x1xi1> to vector<16x32xi1>
    %11 = vector.broadcast %8 : f32 to vector<16x32xf32>
    %12 = arith.select %10, %2, %11 : vector<16x32xi1>, vector<16x32xf32>
    %c0_2 = arith.constant 0 : index
    %c0_3 = arith.constant 0 : index
    %c0_4 = arith.constant 0 : index
    %13 = vector.load %arg3[%c0_2, %c0_3, %c0_4] : memref<1x16x32xf32, #tpu.memory_space<vmem>>, vector<1x16x32xf32>
    %14 = vector.shape_cast %13 : vector<1x16x32xf32> to vector<16x32xf32>
    %15 = tpu.iota {dimensions = array<i32: 0>} : vector<16x1xi32>
    %c16_i32_5 = arith.constant 16 : i32
    %16 = arith.addi %0, %c16_i32_5 : i32
    %17 = vector.broadcast %16 : i32 to vector<16x1xi32>
    %18 = arith.addi %15, %17 : vector<16x1xi32>
    %c8_i32_6 = arith.constant 8 : i32
    %19 = vector.broadcast %c8_i32_6 : i32 to vector<16x1xi32>
    %20 = arith.cmpi slt, %18, %19 : vector<16x1xi32>
    %c0_i32_7 = arith.constant 0 : i32
    %21 = arith.sitofp %c0_i32_7 : i32 to f32
    %22 = vector.shape_cast %20 : vector<16x1xi1> to vector<16x1xi1>
    %23 = vector.broadcast %22 : vector<16x1xi1> to vector<16x32xi1>
    %24 = vector.broadcast %21 : f32 to vector<16x32xf32>
    %25 = arith.select %23, %14, %24 : vector<16x32xi1>, vector<16x32xf32>
    %26 = tpu.concatenate %12, %25 in 0 : vector<16x32xf32>, vector<16x32xf32> -> vector<32x32xf32>
    %cst = arith.constant 5.000000e-01 : f32
    %27 = vector.broadcast %cst : f32 to vector<16x32xf32>
    %28 = arith.mulf %12, %27 : vector<16x32xf32>
    %29 = vector.extract_strided_slice %26 {offsets = [1, 0], sizes = [16, 32], strides = [1, 1]} : vector<32x32xf32> to vector<16x32xf32>
    %cst_8 = arith.constant 5.000000e-01 : f32
    %30 = vector.broadcast %cst_8 : f32 to vector<16x32xf32>
    %31 = arith.mulf %29, %30 : vector<16x32xf32>
    %32 = arith.addf %28, %31 : vector<16x32xf32>
    %33 = vector.extract_strided_slice %26 {offsets = [2, 0], sizes = [16, 32], strides = [1, 1]} : vector<32x32xf32> to vector<16x32xf32>
    %cst_9 = arith.constant 5.000000e-01 : f32
    %34 = vector.broadcast %cst_9 : f32 to vector<16x32xf32>
    %35 = arith.mulf %33, %34 : vector<16x32xf32>
    %36 = arith.addf %28, %35 : vector<16x32xf32>
    %37 = vector.extract_strided_slice %26 {offsets = [3, 0], sizes = [16, 32], strides = [1, 1]} : vector<32x32xf32> to vector<16x32xf32>
    %cst_10 = arith.constant 5.000000e-01 : f32
    %38 = vector.broadcast %cst_10 : f32 to vector<16x32xf32>
    %39 = arith.mulf %37, %38 : vector<16x32xf32>
    %40 = arith.addf %28, %39 : vector<16x32xf32>
    %41 = tpu.concatenate %12, %32, %36, %40 in 1 : vector<16x32xf32>, vector<16x32xf32>, vector<16x32xf32>, vector<16x32xf32> -> vector<16x128xf32>
    %c0_11 = arith.constant 0 : index
    %c0_12 = arith.constant 0 : index
    %c0_13 = arith.constant 0 : index
    %42 = vector.load %arg4[%c0_11, %c0_12, %c0_13] : memref<1x16x128xf32, #tpu.memory_space<vmem>>, vector<1x16x128xf32>
    %43 = vector.shape_cast %42 : vector<1x16x128xf32> to vector<16x128xf32>
    %44 = vector.shape_cast %41 : vector<16x128xf32> to vector<1x16x128xf32>
    tpu.vector_store %arg4[%c0_11, %c0_12, %c0_13], %44 {strides = array<i32>} : memref<1x16x128xf32, #tpu.memory_space<vmem>>, vector<1x16x128xf32>,
    return
  }
  func.func @transform_0(%arg0: i32, %arg1: i32) -> (i32, i32, i32) {
    %c0_i32 = arith.constant 0 : i32
    %c0_i32_0 = arith.constant 0 : i32
    return %arg0, %arg1, %c0_i32 : i32, i32, i32
  }
  func.func @transform_1(%arg0: i32, %arg1: i32) -> (i32, i32, i32) {
    %c1_i32 = arith.constant 1 : i32
    %0 = arith.addi %arg1, %c1_i32 : i32
    %c1_i32_0 = arith.constant 1 : i32
    %1 = arith.muli %0, %c1_i32_0 : i32
    %c0_i32 = arith.constant 0 : i32
    %2 = arith.minsi %1, %c0_i32 : i32
    %c0_i32_1 = arith.constant 0 : i32
    %c0_i32_2 = arith.constant 0 : i32
    return %arg0, %2, %c0_i32_1 : i32, i32, i32
  }
  func.func @transform_2(%arg0: i32, %arg1: i32) -> (i32, i32, i32) {
    %c0_i32 = arith.constant 0 : i32
    %c0_i32_0 = arith.constant 0 : i32
    return %arg0, %arg1, %c0_i32 : i32, i32, i32
  }
}

</mosaic_0001>

<llo_original>
// kernel: tpu_custom_call.1
$region0: #{tpu_custom_call.1}
  #allocation0 [shape = 'u32[]', space=smem, size = 0x4, offset = 0x4, fixed_abs, tag = 'smem constant byte address 0x4 - core index']
  #allocation1 [shape = 'u32[144,128]{1,0:T(1,128)}', space=vmem, size = 0x12000, scoped, tag = 'internal scratch']
  %s0 = inlined_call_operand.hbm [shape: f32[2,8,32], index: 0, kind: input, shape index: {}]
  %s1 = inlined_call_operand.hbm [shape: f32[2,8,32], index: 1, kind: input, shape index: {}]
  %s2 = inlined_call_operand.hbm [shape: f32[2,8,128], index: 2, kind: output, shape index: {}]
  %s3 = sld [smem:[#allocation0]]
  $region49: #{tpu_custom_call.1} parent=0
    _
  %s5 = ssub.s32 1, %s3
  %s6 = scalar_select 0, %s5, %s3
  $region1: #{tpu_custom_call.1} parent=0
    #allocation2 [shape = 'u8[16384]{0}', space=vmem, size = 0x4000, scoped, tag = 'input window, operand 0']
    #allocation3 [shape = 's32[2]{0}', space=sflag, size = 0x8, scoped, tag = 'scoped memory for tpu_custom_call.1']
    #allocation4 [shape = 's32[2]{0}', space=sflag, size = 0x8, scoped, tag = 'scoped memory for tpu_custom_call.1']
    #allocation5 [shape = 'u8[16384]{0}', space=vmem, size = 0x4000, scoped, tag = 'input window, operand 1']
    #allocation6 [shape = 's32[2]{0}', space=sflag, size = 0x8, scoped, tag = 'scoped memory for tpu_custom_call.1']
    #allocation7 [shape = 'u8[16384]{0}', space=vmem, size = 0x4000, scoped, tag = 'output window, operand 0']
    %7 = vsyncpa [#allocation3], 0
    %s8 = scalar_lea.sflag [#allocation3], 1
    %9 = vsyncpa %s8, 0
    %10 = vsyncpa [#allocation6], 0
    %s11 = scalar_lea.sflag [#allocation6], 1
    %12 = vsyncpa %s11, 0
    %13 = vsyncpa [#allocation4], 0
    %s14 = scalar_lea.sflag [#allocation4], 1
    %15 = vsyncpa %s14, 0
    loop: start=0, step=1, limit=4
    $region2: #{tpu_custom_call.1} parent=1 // loop_pre_header
      _
    $region3: #{tpu_custom_call.1} parent=1 // loop_header
      %s17 = sphi 0, %s21
      %p18 = scmp.ge.s32.totalorder %s17, 4
      %s24 = sphi 0, %s36
      %s25 = sphi 0, %s32
      %s26 = sphi 0, %s24
      %s27 = sphi 0, %s25
      %s28 = sphi 0, %s26
      %s29 = sphi 0, %s27
      %s41 = sphi 0, %s43
      %s44 = sphi 0, %s41
      %s45 = sphi 0, %s44
      %s61 = sphi 0, %s45
      %s75 = sphi 0, %s77
      %s78 = sphi 0, %s75
      %s79 = sphi 0, %s78
      %s95 = sphi 0, %s79
      %s103 = sphi 0, %s105
      %s106 = sphi 0, %s103
      %s107 = sphi 0, %s106
      %s123 = sphi 0, %s107
    $region4: #{tpu_custom_call.1} parent=1 // loop_header_branch
      %20 = sbr.rel (%p18) target = $region8
    $region5: #{tpu_custom_call.1} parent=1 // loop_body
      %s22 = ssub.s32 %s17, 1
      %s23 = ssub.s32 %s17, 2
      %s30 = sadd.s32 1, %s25
      %p31 = scmp.ge.s32.totalorder %s30, 1
      %s32 = scalar_select %p31, 0, %s30
      %s33 = sadd.s32 1, %s24
      %s34 = scalar_select %p31, %s33, %s24
      %p35 = scmp.ge.s32.totalorder %s34, 2
      %s36 = scalar_select %p35, 0, %s34
      %s37 = ssub.s32 %s24, %s36
      %s38 = ssub.s32 %s25, %s32
      %s39 = sor.u32 %s37, %s38
      %p40 = scmp.eq.s32.totalorder %s39, 0
      %s42 = sadd.s32 %s41, 1
      %s43 = scalar_select %p40, %s41, %s42
      %p46 = pneg %p40
      %p47 = scmp.eq.s32.totalorder %s17, 1
      %p48 = por %p46, %p47
      %p49 = scmp.ne.s32.totalorder %s41, %s44
      %p50 = scmp.eq.s32.totalorder %s17, 0
      %p51 = por %p49, %p50
      %p52 = scmp.ne.s32.totalorder %s41, %s44
      %p53 = scmp.eq.s32.totalorder %s22, 1
      %p54 = por %p52, %p53
      %p55 = scmp.ne.s32.totalorder %s44, %s45
      %p56 = scmp.eq.s32.totalorder %s22, 0
      %p57 = por %p55, %p56
      %p58 = scmp.ne.s32.totalorder %s44, %s45
      %p59 = scmp.eq.s32.totalorder %s23, 1
      %p60 = por %p58, %p59
      %p62 = scmp.ne.s32.totalorder %s45, %s61
      %p63 = scmp.eq.s32.totalorder %s23, 0
      %p64 = por %p62, %p63
      %s65 = sadd.s32 %s25, 1
      %p66 = scmp.lt.s32.totalorder %s65, 0
      %s67 = scalar_select %p66, %s65, 0
      %s68 = sadd.s32 %s32, 1
      %p69 = scmp.lt.s32.totalorder %s68, 0
      %s70 = scalar_select %p69, %s68, 0
      %s71 = ssub.s32 %s24, %s36
      %s72 = ssub.s32 %s67, %s70
      %s73 = sor.u32 %s71, %s72
      %p74 = scmp.eq.s32.totalorder %s73, 0
      %s76 = sadd.s32 %s75, 1
      %s77 = scalar_select %p74, %s75, %s76
      %p80 = pneg %p74
      %p81 = scmp.eq.s32.totalorder %s17, 1
      %p82 = por %p80, %p81
      %p83 = scmp.ne.s32.totalorder %s75, %s78
      %p84 = scmp.eq.s32.totalorder %s17, 0
      %p85 = por %p83, %p84
      %p86 = scmp.ne.s32.totalorder %s75, %s78
      %p87 = scmp.eq.s32.totalorder %s22, 1
      %p88 = por %p86, %p87
      %p89 = scmp.ne.s32.totalorder %s78, %s79
      %p90 = scmp.eq.s32.totalorder %s22, 0
      %p91 = por %p89, %p90
      %p92 = scmp.ne.s32.totalorder %s78, %s79
      %p93 = scmp.eq.s32.totalorder %s23, 1
      %p94 = por %p92, %p93
      %p96 = scmp.ne.s32.totalorder %s79, %s95
      %p97 = scmp.eq.s32.totalorder %s23, 0
      %p98 = por %p96, %p97
      %s99 = ssub.s32 %s24, %s36
      %s100 = ssub.s32 %s25, %s32
      %s101 = sor.u32 %s99, %s100
      %p102 = scmp.eq.s32.totalorder %s101, 0
      %s104 = sadd.s32 %s103, 1
      %s105 = scalar_select %p102, %s103, %s104
      %p108 = pneg %p102
      %p109 = scmp.eq.s32.totalorder %s17, 1
      %p110 = por %p108, %p109
      %p111 = scmp.ne.s32.totalorder %s103, %s106
      %p112 = scmp.eq.s32.totalorder %s17, 0
      %p113 = por %p111, %p112
      %p114 = scmp.ne.s32.totalorder %s103, %s106
      %p115 = scmp.eq.s32.totalorder %s22, 1
      %p116 = por %p114, %p115
      %p117 = scmp.ne.s32.totalorder %s106, %s107
      %p118 = scmp.eq.s32.totalorder %s22, 0
      %p119 = por %p117, %p118
      %p120 = scmp.ne.s32.totalorder %s106, %s107
      %p121 = scmp.eq.s32.totalorder %s23, 1
      %p122 = por %p120, %p121
      %p124 = scmp.ne.s32.totalorder %s107, %s123
      %p125 = scmp.eq.s32.totalorder %s23, 0
      %p126 = por %p124, %p125
      %p127 = scmp.le.s32.totalorder 1, %s17
      %p128 = scmp.lt.s32.totalorder %s17, 3
      %p129 = pnand %p127, %p128
      %p130 = pneg %p129
      // Predicated region
      $region9: #{tpu_custom_call.1} parent=5 // pred_check
        _
      $region10: #{tpu_custom_call.1} parent=5 // pred_check_branch
        %132 = sbr.rel (%p129) target = $region12
      $region11: #{tpu_custom_call.1} parent=5 // pred_region
        %s133 = ssub.s32 %s17, 1
      $region12: #{tpu_custom_call.1} parent=5 // pred_fallthru
        _
      %p134 = scmp.lt.s32.totalorder %s17, 2
      // Predicated region
      $region13: #{tpu_custom_call.1} parent=5 // pred_check
        %p135 = pneg %p134
      $region14: #{tpu_custom_call.1} parent=5 // pred_check_branch
        %137 = sbr.rel (%p135) target = $region16
      $region15: #{tpu_custom_call.1} parent=5 // pred_region
        // Predicated region
        $region17: #{tpu_custom_call.1} parent=15 // pred_check
          %p138 = pneg %p51
        $region18: #{tpu_custom_call.1} parent=15 // pred_check_branch
          %140 = sbr.rel (%p138) target = $region20
        $region19: #{tpu_custom_call.1} parent=15 // pred_region
          %s141 = sand.u32 %s41, 1
          %s142 = scalar_lea.sflag [#allocation3], %s141
          %s143 = sand.u32 %s41, 1
          %s144 = smul.addr %s143, 16
          %s145 = scalar_lea.vmem [#allocation2], %s144
          %s146 = smul.u32 2, %s25
          %s147 = ssub.s32 1, %s146
          %s148 = smul.u32 128, %s147
          %s150 = ssub.s32 256, %s148
          %151 = vsyncadd %s142, %s150
          %p152 = scmp.ne.s32.totalorder 0, %s148
          %s153 = sadd.s32 %s146, %s24
          %s154 = smul.addr %s153, 128
          %s155 = scalar_lea.hbm %s0, %s154
          %s156 = smul.u32 8, %s147
          %s157 = sshll.u32 %s145, 4
          %s158 = int_to_ptr.vmem [resolvable:$true] %s157
          %s159 = sshll.u32 %s156, 4
          %163 = dma.hbm_to_vmem [thread:$0]  (%p152), %s155, %s159, %s158, %s142, 128, 128, 8
        $region20: #{tpu_custom_call.1} parent=15 // pred_fallthru
          _
        // Predicated region
        $region21: #{tpu_custom_call.1} parent=15 // pred_check
          %p164 = pneg %p85
        $region22: #{tpu_custom_call.1} parent=15 // pred_check_branch
          %166 = sbr.rel (%p164) target = $region24
        $region23: #{tpu_custom_call.1} parent=15 // pred_region
          %s167 = sand.u32 %s75, 1
          %s168 = scalar_lea.sflag [#allocation6], %s167
          %s169 = sand.u32 %s75, 1
          %s170 = smul.addr %s169, 16
          %s171 = scalar_lea.vmem [#allocation5], %s170
          %s172 = sadd.s32 %s25, 1
          %p173 = scmp.lt.s32.totalorder %s172, 0
          %s174 = scalar_select %p173, %s172, 0
          %s175 = smul.u32 2, %s174
          %s176 = ssub.s32 1, %s175
          %s177 = smul.u32 128, %s176
          %s179 = ssub.s32 256, %s177
          %180 = vsyncadd %s168, %s179
          %p181 = scmp.ne.s32.totalorder 0, %s177
          %s182 = sadd.s32 %s175, %s24
          %s183 = smul.addr %s182, 128
          %s184 = scalar_lea.hbm %s1, %s183
          %s185 = smul.u32 8, %s176
          %s186 = sshll.u32 %s171, 4
          %s187 = int_to_ptr.vmem [resolvable:$true] %s186
          %s188 = sshll.u32 %s185, 4
          %192 = dma.hbm_to_vmem [thread:$0]  (%p181), %s184, %s188, %s187, %s168, 128, 128, 8
        $region24: #{tpu_custom_call.1} parent=15 // pred_fallthru
          _
      $region16: #{tpu_custom_call.1} parent=5 // pred_fallthru
        _
      %p193 = scmp.le.s32.totalorder 1, %s17
      %p194 = scmp.lt.s32.totalorder %s17, 3
      %p195 = pnand %p193, %p194
      %p196 = pneg %p195
      // Predicated region
      $region25: #{tpu_custom_call.1} parent=5 // pred_check
        _
      $region26: #{tpu_custom_call.1} parent=5 // pred_check_branch
        %198 = sbr.rel (%p195) target = $region28
      $region27: #{tpu_custom_call.1} parent=5 // pred_region
        %s199 = ssub.s32 %s17, 1
        %s200 = sand.u32 %s44, 1
        %s201 = scalar_lea.sflag [#allocation3], %s200
        %s202 = sand.u32 %s44, 1
        %s203 = smul.addr %s202, 16
        %s204 = scalar_lea.vmem [#allocation2], %s203
        // Predicated region
        $region29: #{tpu_custom_call.1} parent=27 // pred_check
          %p205 = pneg %p57
        $region30: #{tpu_custom_call.1} parent=27 // pred_check_branch
          %207 = sbr.rel (%p205) target = $region32
        $region31: #{tpu_custom_call.1} parent=27 // pred_region
          %208 = dma.done %s201, 256
        $region32: #{tpu_custom_call.1} parent=27 // pred_fallthru
          _
        %s209 = sand.u32 %s78, 1
        %s210 = scalar_lea.sflag [#allocation6], %s209
        %s211 = sand.u32 %s78, 1
        %s212 = smul.addr %s211, 16
        %s213 = scalar_lea.vmem [#allocation5], %s212
        // Predicated region
        $region33: #{tpu_custom_call.1} parent=27 // pred_check
          %p214 = pneg %p91
        $region34: #{tpu_custom_call.1} parent=27 // pred_check_branch
          %216 = sbr.rel (%p214) target = $region36
        $region35: #{tpu_custom_call.1} parent=27 // pred_region
          %217 = dma.done %s210, 256
        $region36: #{tpu_custom_call.1} parent=27 // pred_fallthru
          _
        %s218 = sand.u32 %s44, 1
        %s219 = scalar_lea.sflag [#allocation3], %s218
        %s220 = sand.u32 %s44, 1
        %s221 = smul.addr %s220, 16
        %s222 = scalar_lea.vmem [#allocation2], %s221
        %p223 = pneg %p57
        %p224 = pneg %p54
        %s225 = sand.u32 %s78, 1
        %s226 = scalar_lea.sflag [#allocation6], %s225
        %s227 = sand.u32 %s78, 1
        %s228 = smul.addr %s227, 16
        %s229 = scalar_lea.vmem [#allocation5], %s228
        %p230 = pneg %p91
        %p231 = pneg %p88
        %p232 = pneg %p119
        %p233 = pneg %p116
        %s234 = sand.u32 %s106, 1
        %s235 = scalar_lea.sflag [#allocation4], %s234
        %s236 = sand.u32 %s106, 1
        %s237 = smul.addr %s236, 16
        %s238 = scalar_lea.vmem [#allocation7], %s237
        %s239 = smul.u32 2, %s27
        %s240 = ssub.s32 1, %s239
        %s241 = smul.u32 128, %s240
        %s242 = sadd.s32 %s27, 1
        %p243 = scmp.lt.s32.totalorder %s242, 0
        %s244 = scalar_select %p243, %s242, 0
        %s245 = smul.u32 2, %s244
        %s246 = ssub.s32 1, %s245
        %s247 = smul.u32 128, %s246
        %s248 = smul.u32 2, %s27
        %s249 = ssub.s32 1, %s248
        %s250 = smul.u32 128, %s249
        %s251 = smul.u32 %s27, 16
        %v252 = vld [vmem:[%s204] sm:$0xff]
        %v253 = vld [vmem:[%s204 + $0x8] sm:$0xff]
        %v254 = vlaneseq
        %v255 = vshrl.u32 %v254, 7
        %v256 = vadd.s32 %v255, 8
        %v257 = vstv %s251
        %v258 = vadd.s32 %v255, %v257
        %v259 = vadd.s32 %v256, %v257
        %vm260 = vcmp.lt.s32.totalorder %v258, 8
        %vm261 = vcmp.lt.s32.totalorder %v259, 8
        %v262 = vsel %vm260, 1, 0
        %v263 = vsel %vm261, 1, 0
        %vm264 = vcmp.eq.s32.totalorder %v262, 1
        %vm265 = vcmp.eq.s32.totalorder %v263, 1
        %v266 = vsel %vm264, %v252, 0.0
        %v267 = vsel %vm265, %v253, 0.0
        %v268 = vld [vmem:[%s213] sm:$0xff]
        %s269 = sadd.s32 %s251, 16
        %v270 = vstv %s269
        %v271 = vadd.s32 %v255, %v270
        %vm272 = vcmp.lt.s32.totalorder %v271, 8
        %v273 = vsel %vm272, 1, 0
        %vm274 = vcmp.eq.s32.totalorder %v273, 1
        %v275 = vsel %vm274, %v268, 0.0
        %v276 = vmul.f32 %v266, 0.5
        %v277 = vmul.f32 %v267, 0.5
        %v278 = vmul.f32 %v275, 0.5
        %vm282 = vcmask 1046528
        %v283 = vrot.slane %v276, 1
        %v284 = vrot.slane %v277, 1
        %v285 = vsel %vm282, %v283, %v284
        %v286 = vrot.slane %v278, 1
        %v287 = vsel %vm282, %v284, %v286
        %v290 = vadd.f32 %v276, %v285
        %v291 = vadd.f32 %v277, %v287
        %vm292 = vcmask 1045504
        %v293 = vrot.slane %v276, 2
        %v294 = vrot.slane %v277, 2
        %v295 = vsel %vm292, %v293, %v294
        %v296 = vrot.slane %v278, 2
        %v297 = vsel %vm292, %v294, %v296
        %v300 = vadd.f32 %v276, %v295
        %v301 = vadd.f32 %v277, %v297
        %vm302 = vcmask 1044480
        %v303 = vrot.slane %v276, 3
        %v304 = vrot.slane %v277, 3
        %v305 = vsel %vm302, %v303, %v304
        %v306 = vrot.slane %v278, 3
        %v307 = vsel %vm302, %v304, %v306
        %v310 = vadd.f32 %v276, %v305
        %v311 = vadd.f32 %v277, %v307
        %314 = vrot.lane.b32.xlu0 %v290, 32
        %v315 = vpop.permute.xlu0 %314
        %316 = vrot.lane.b32.xlu0 %v291, 32
        %v317 = vpop.permute.xlu0 %316
        %322 = vrot.lane.b32.xlu0 %v300, 64
        %v323 = vpop.permute.xlu0 %322
        %324 = vrot.lane.b32.xlu0 %v301, 64
        %v325 = vpop.permute.xlu0 %324
        %330 = vrot.lane.b32.xlu0 %v310, 96
        %v331 = vpop.permute.xlu0 %330
        %332 = vrot.lane.b32.xlu0 %v311, 96
        %v333 = vpop.permute.xlu0 %332
        %vm336 = vcmask 261120
        %v337 = vsel %vm336, %v266, %v315
        %v338 = vsel %vm336, %v267, %v317
        %vm339 = vcmask 523264
        %v340 = vsel %vm339, %v337, %v323
        %v341 = vsel %vm339, %v338, %v325
        %vm342 = vcmask 785408
        %v343 = vsel %vm342, %v340, %v331
        %v344 = vsel %vm342, %v341, %v333
        %345 = vst [vmem:[%s238] sm:$0xff] %v343
        %346 = vst [vmem:[%s238 + $0x8] sm:$0xff] %v344
        %s347 = sand.u32 %s106, 1
        %s348 = scalar_lea.sflag [#allocation4], %s347
        %s349 = sand.u32 %s106, 1
        %s350 = smul.addr %s349, 16
        %s351 = scalar_lea.vmem [#allocation7], %s350
        // Predicated region
        $region37: #{tpu_custom_call.1} parent=27 // pred_check
          %p352 = pneg %p116
        $region38: #{tpu_custom_call.1} parent=27 // pred_check_branch
          %354 = sbr.rel (%p352) target = $region40
        $region39: #{tpu_custom_call.1} parent=27 // pred_region
          %s355 = smul.u32 2, %s27
          %s356 = ssub.s32 1, %s355
          %s357 = smul.u32 128, %s356
          %s359 = ssub.s32 256, %s357
          %360 = vsyncadd %s348, %s359
          %p361 = scmp.ne.s32.totalorder 0, %s357
          %s362 = sadd.s32 %s355, %s26
          %s363 = smul.addr %s362, 128
          %s364 = scalar_lea.hbm %s2, %s363
          %s365 = smul.u32 8, %s356
          %s366 = sshll.u32 %s351, 4
          %s367 = int_to_ptr.vmem [resolvable:$true] %s366
          %s368 = sshll.u32 %s365, 4
          %372 = dma.vmem_to_hbm [thread:$0]  (%p361), %s367, %s368, %s364, %s348, 128, 128, 8
        $region40: #{tpu_custom_call.1} parent=27 // pred_fallthru
          _
      $region28: #{tpu_custom_call.1} parent=5 // pred_fallthru
        _
      %p373 = scmp.le.s32.totalorder 2, %s17
      // Predicated region
      $region41: #{tpu_custom_call.1} parent=5 // pred_check
        %p374 = pneg %p373
      $region42: #{tpu_custom_call.1} parent=5 // pred_check_branch
        %376 = sbr.rel (%p374) target = $region44
      $region43: #{tpu_custom_call.1} parent=5 // pred_region
        %s377 = ssub.s32 %s17, 2
        // Predicated region
        $region45: #{tpu_custom_call.1} parent=43 // pred_check
          %p378 = pneg %p122
        $region46: #{tpu_custom_call.1} parent=43 // pred_check_branch
          %380 = sbr.rel (%p378) target = $region48
        $region47: #{tpu_custom_call.1} parent=43 // pred_region
          %s381 = sand.u32 %s107, 1
          %s382 = scalar_lea.sflag [#allocation4], %s381
          %s383 = sand.u32 %s107, 1
          %s384 = smul.addr %s383, 16
          %s385 = scalar_lea.vmem [#allocation7], %s384
          %386 = dma.done %s382, 256
        $region48: #{tpu_custom_call.1} parent=43 // pred_fallthru
          _
      $region44: #{tpu_custom_call.1} parent=5 // pred_fallthru
        _
    $region6: #{tpu_custom_call.1} parent=1 // loop_footer
      %s21 = sadd.s32 1, %s17
    $region7: #{tpu_custom_call.1} parent=1 // loop_footer_branch
      %16 = sbr.rel target = $region3
    $region8: #{tpu_custom_call.1} parent=1 // loop_exit
      _
    %387 = vsyncpa [#allocation3], 1
    %s388 = scalar_lea.sflag [#allocation3], 1
    %389 = vsyncpa %s388, 1
    %390 = vsyncpa [#allocation6], 1
    %s391 = scalar_lea.sflag [#allocation6], 1
    %392 = vsyncpa %s391, 1
    %393 = vsyncpa [#allocation4], 1
    %s394 = scalar_lea.sflag [#allocation4], 1
    %395 = vsyncpa %s394, 1

</llo_original>
